<compile_context>
chip_gen: v6e
topology: v6e:2x2x1
jax: 0.10.0
libtpu: 0.0.40
codegen_flags: <defaults>
</compile_context>

<pallas_src>
import jax
import jax.numpy as jnp
from jax import lax
from jax.experimental import pallas as pl
from jax.experimental.pallas import tpu as pltpu

_LANE = 128


# ----------------------------------------------------------------------------
# Contractions: MXU batched dot_general (primary) / VPU multiply+reduce (fallback)
# ----------------------------------------------------------------------------
def _scores(v, h, use_dot):
    """scores[b, s] = <v[b, s, :], h[b, :]>, accumulated in f32."""
    if use_dot:
        return lax.dot_general(
            v, h,
            dimension_numbers=(((2,), (1,)), ((0,), (0,))),
            preferred_element_type=jnp.float32)
    return jnp.sum(v.astype(jnp.float32) * h.astype(jnp.float32)[:, None, :],
                   axis=-1)


def _weighted_sum(w, v, use_dot):
    """out[b, h] = sum_s w[b, s] * v[b, s, h], accumulated in f32."""
    if use_dot:
        return lax.dot_general(
            w.astype(v.dtype), v,
            dimension_numbers=(((1,), (1,)), ((0,), (0,))),
            preferred_element_type=jnp.float32)
    return jnp.sum(w[:, :, None] * v.astype(jnp.float32), axis=1)


# ----------------------------------------------------------------------------
# Kernels
# ----------------------------------------------------------------------------
def _make_full_kernel(*, use_dot, approx):
    """Whole sequence resident: one grid axis over batch tiles."""

    def kernel(v_ref, h_ref, ctx_ref, attn_ref):
        v = v_ref[...]                                   # (TB, S, H)
        h = h_ref[...]                                   # (TB, H)
        scores = _scores(v, h, use_dot)                  # (TB, S) f32
        m = jnp.max(scores, axis=-1, keepdims=True)
        e = jnp.exp(scores - m)
        denom = jnp.sum(e, axis=-1, keepdims=True)
        alpha = e * pl.reciprocal(denom, approx=approx)  # EUP vrcp if approx
        ctx = _weighted_sum(alpha, v, use_dot)           # (TB, H) f32
        attn_ref[...] = alpha.astype(attn_ref.dtype)
        ctx_ref[...] = ctx.astype(ctx_ref.dtype)

    return kernel


def _make_seq_kernel(*, ts, n_s, seq_len, use_dot, approx):
    """Sequence-tiled online softmax: grid = (batch tiles, seq chunks)."""
    ragged = (seq_len % ts) != 0

    def kernel(v_ref, h_ref, ctx_ref, attn_ref, sc_ref, m_ref, l_ref, acc_ref):
        s = pl.program_id(1)

        @pl.when(s == 0)
        def _init():
            m_ref[...] = jnp.full(m_ref.shape, -jnp.inf, dtype=jnp.float32)
            l_ref[...] = jnp.zeros(l_ref.shape, dtype=jnp.float32)
            acc_ref[...] = jnp.zeros(acc_ref.shape, dtype=jnp.float32)

        v = v_ref[...]                                   # (TB, TS, H)
        h = h_ref[...]                                   # (TB, H)

        if ragged:
            # Mask out-of-range sequence columns of the ragged last chunk
            # (keeps stale VMEM in the padded region out of the softmax/ctx).
            col_ok = (s * ts + lax.broadcasted_iota(
                jnp.int32, (v.shape[0], ts), 1)) < seq_len        # (TB, TS)
            row3 = s * ts + lax.broadcasted_iota(jnp.int32, v.shape, 1)
            v = jnp.where(row3 < seq_len, v, jnp.zeros_like(v))

        scores = _scores(v, h, use_dot)                  # (TB, TS) f32
        if ragged:
            scores = jnp.where(col_ok, scores, -jnp.inf)

        sc_ref[s] = scores                               # keep raw scores

        m_prev = m_ref[...]
        m_new = jnp.maximum(m_prev, jnp.max(scores, axis=-1, keepdims=True))
        corr = jnp.exp(m_prev - m_new)
        p = jnp.exp(scores - m_new)
        l_ref[...] = corr * l_ref[...] + jnp.sum(p, axis=-1, keepdims=True)
        acc_ref[...] = corr * acc_ref[...] + _weighted_sum(p, v, use_dot)
        m_ref[...] = m_new

        @pl.when(s == n_s - 1)
        def _finalize():
            inv_l = pl.reciprocal(l_ref[...], approx=approx)
            ctx_ref[...] = (acc_ref[...] * inv_l).astype(ctx_ref.dtype)
            m_fin = m_ref[...]
            for t in range(n_s):                         # static unroll
                w = min(ts, seq_len - t * ts)
                alpha_t = jnp.exp(sc_ref[t] - m_fin) * inv_l
                attn_ref[:, t * ts:t * ts + w] = alpha_t[:, :w].astype(
                    attn_ref.dtype)

    return kernel


# ----------------------------------------------------------------------------
# Tiling / pallas_call construction
# ----------------------------------------------------------------------------
def _round_up(x, m):
    return -(-x // m) * m


def _vmem_capacity_bytes():
    try:
        cap = getattr(pltpu.get_tpu_info(), "vmem_capacity_bytes", None)
        if cap:
            return int(cap)
    except Exception:
        pass
    return 64 * 1024 * 1024  # conservative default (v7x physical VMEM per TC)


def _maybe_buffered_spec(block_shape, index_map, multi_buffer):
    """V BlockSpec; 3-deep pipeline when blocks are small and steps are many."""
    if multi_buffer:
        try:
            return pl.BlockSpec(block_shape, index_map,
                                pipeline_mode=pl.Buffered(3))
        except TypeError:  # pragma: no cover - older BlockSpec signature
            pass
    return pl.BlockSpec(block_shape, index_map)


def _build_call(B, S, H, dtype, *, budget, vmem_limit, use_dot, approx):
    it = jnp.dtype(dtype).itemsize
    sub = {4: 8, 2: 16, 1: 32}.get(it, 8)       # sublane granule for this dtype
    h_pad = _round_up(H, _LANE)                 # lane padding of the minor dim
    s_sub = _round_up(S, sub)                   # sublane padding inside (TB,S,H)
    s_lane = _round_up(S, _LANE)                # lane padding of (TB,S) arrays

    # Padded VMEM bytes per batch row with the whole sequence resident.
    per_row = 2 * s_sub * h_pad * it            # V block (double-buffered)
    per_row += 2 * h_pad * it                   # h_t block
    per_row += 2 * (h_pad + s_lane) * it        # ctx + attn output blocks
    per_row += 4 * s_lane * 4 + 2 * h_pad * 4   # f32 temporaries
    if not use_dot:
        per_row += 2 * s_sub * h_pad * 4        # broadcast products (VPU path)

    tb_min = min(8, B)

    if per_row * tb_min <= budget:
        # ---- full-sequence path: 1-D grid over batch tiles ------------------
        tb = max(tb_min, (min(budget // per_row, 512) // 8) * 8)
        if B > 8:                                # >=2 steps -> both v7x cores busy
            tb = min(tb, _round_up(pl.cdiv(B, 2), 8))
        if B >= 32:                              # >=~4 steps hides pipeline ramp
            tb = min(tb, _round_up(pl.cdiv(B, 4), 8))
        tb = min(tb, B)
        nb = pl.cdiv(B, tb)

        grid_spec = pltpu.PrefetchScalarGridSpec(
            num_scalar_prefetch=0,
            grid=(nb,),
            in_specs=[
                pl.BlockSpec((tb, S, H), lambda i: (i, 0, 0)),
                pl.BlockSpec((tb, H), lambda i: (i, 0)),
            ],
            out_specs=[
                pl.BlockSpec((tb, H), lambda i: (i, 0)),
                pl.BlockSpec((tb, S), lambda i: (i, 0)),
            ],
        )
        kernel = _make_full_kernel(use_dot=use_dot, approx=approx)
        semantics = ("parallel",)
    else:
        # ---- sequence-tiled path: online softmax over S chunks --------------
        tb = tb_min
        resident = tb * (2 * s_lane * it             # attn output block
                         + (s_lane + _LANE) * 4      # raw-score scratch
                         + 2 * h_pad * it            # h_t block
                         + 2 * h_pad * it            # ctx output block
                         + h_pad * 4 + 8)            # acc / m / l scratch
        per_col = tb * (2 * h_pad * it + 6 * 4)      # V (dbuf) + f32 temps/col
        avail = max(budget - resident, 0)
        ts = min(avail // per_col, 4096)
        if ts >= S:
            ts = S        # degenerate: one chunk (row slab bigger than budget)
        elif ts >= _LANE:
            ts = (ts // _LANE) * _LANE
        else:
            ts = max(sub, (ts // sub) * sub)
        n_s = pl.cdiv(S, ts)
        nb = pl.cdiv(B, tb)

        multi_buf = (nb * n_s >= 4) and (tb * ts * h_pad * it < 4 * 1024 * 1024)
        v_spec = _maybe_buffered_spec((tb, ts, H), lambda i, j: (i, j, 0),
                                      multi_buf)

        grid_spec = pltpu.PrefetchScalarGridSpec(
            num_scalar_prefetch=0,
            grid=(nb, n_s),
            in_specs=[
                v_spec,
                pl.BlockSpec((tb, H), lambda i, j: (i, 0)),
            ],
            out_specs=[
                pl.BlockSpec((tb, H), lambda i, j: (i, 0)),
                pl.BlockSpec((tb, S), lambda i, j: (i, 0)),
            ],
            scratch_shapes=[
                pltpu.VMEM((n_s, tb, ts), jnp.float32),   # raw scores
                pltpu.VMEM((tb, 1), jnp.float32),         # running max
                pltpu.VMEM((tb, 1), jnp.float32),         # running denom
                pltpu.VMEM((tb, H), jnp.float32),         # context accumulator
            ],
        )
        kernel = _make_seq_kernel(ts=ts, n_s=n_s, seq_len=S,
                                  use_dot=use_dot, approx=approx)
        semantics = ("parallel", "arbitrary")

    return pl.pallas_call(
        kernel,
        out_shape=(
            jax.ShapeDtypeStruct((B, H), dtype),
            jax.ShapeDtypeStruct((B, S), dtype),
        ),
        grid_spec=grid_spec,
        compiler_params=pltpu.CompilerParams(
            dimension_semantics=semantics,
            vmem_limit_bytes=vmem_limit,
        ),
    )


def attention_mechanism(V, h_t, *, tile_vmem_bytes=None, approx_reciprocal=True):
    """Dot-product attention.  V: (B, S, H), h_t: (B, H).

    Returns (context (B, H), attention weights (B, S)).
    approx_reciprocal=True uses the EUP reciprocal (~1e-3 relative error in the
    weights); set False if exact softmax normalization is required.
    """
    B, S, H = V.shape
    assert h_t.shape == (B, H), (V.shape, h_t.shape)

    cap = _vmem_capacity_bytes()
    vmem_limit = int(cap * 0.90)       # compiler scoped-VMEM limit
    budget = int(cap * 0.70)           # tiling target (headroom under the limit)
    if tile_vmem_bytes is not None:
        budget = min(budget, int(tile_vmem_bytes))

    def run(use_dot):
        call = _build_call(B, S, H, V.dtype, budget=budget,
                           vmem_limit=vmem_limit, use_dot=use_dot,
                           approx=approx_reciprocal)
        return call(V, h_t)

    try:
        return run(True)               # MXU batched dot_general contractions
    except Exception:                  # pragma: no cover
        # TODO(synk): fallback for Mosaic builds whose lowering rejects batched
        # dot_general; keeps the kernel running on the VPU multiply+reduce path.
        return run(False)


# ----------------------------------------------------------------------------
# Reference + demo
# ----------------------------------------------------------------------------
def _reference(V, h_t):
    f32 = jnp.float32
    scores = jnp.einsum("bsh,bh->bs", V.astype(f32), h_t.astype(f32))
    alpha = jax.nn.softmax(scores, axis=-1)
    ctx = jnp.einsum("bs,bsh->bh", alpha, V.astype(f32))
    return ctx.astype(V.dtype), alpha.astype(V.dtype)


if __name__ == "__main__":
    root = jax.random.PRNGKey(0)

    def run_case(idx, name, B, S, H, **kwargs):
        kv, kh = jax.random.split(jax.random.fold_in(root, idx))
        V = jax.random.normal(kv, (B, S, H), dtype=jnp.float32)
        h_t = jax.random.normal(kh, (B, H), dtype=jnp.float32)
        ctx, attn = attention_mechanism(V, h_t, **kwargs)
        jax.block_until_ready((ctx, attn))
        ctx_ref, attn_ref = _reference(V, h_t)
        # approx reciprocal introduces ~1e-3 relative error in the weights.
        assert jnp.allclose(attn, attn_ref, atol=2e-3, rtol=2e-3), (
            name, float(jnp.max(jnp.abs(attn - attn_ref))))
        assert jnp.allclose(ctx, ctx_ref, atol=5e-3, rtol=5e-3), (
            name, float(jnp.max(jnp.abs(ctx - ctx_ref))))

    # Small shapes consistent with the module's (input_size, hidden_size,
    # batch_size) signature.  batch=12 is deliberately not a multiple of the
    # 8-row batch tile: exercises the ragged last block (no wrapper-side
    # padding copy of V any more).
    run_case(0, "full_seq", B=12, S=8, H=32)
    # Force the sequence-tiled online-softmax path with a small tiling budget
    # (exercises m/l/acc scratch, pl.when init/finalize, Buffered(3) V stream).
    run_case(1, "seq_tiled", B=12, S=256, H=128, tile_vmem_bytes=1_200_000)
    # Ragged sequence tail (S % TS != 0) -> exercises the in-kernel column mask.
    run_case(2, "seq_ragged", B=9, S=200, H=128, tile_vmem_bytes=1_000_000)

    print("KERNEL_OK")
</pallas_src>

<mosaic_0001>
module attributes {stable_mosaic.version = 11 : i64} {
  func.func @kernel(%arg0: i32, %arg1: memref<8x8x32xf32, #tpu.memory_space<vmem>>, %arg2: memref<8x32xf32, #tpu.memory_space<vmem>>, %arg3: memref<8x32xf32, #tpu.memory_space<vmem>>, %arg4: memref<8x8xf32, #tpu.memory_space<vmem>>) attributes {dimension_semantics = [#tpu.dimension_semantics<parallel>], iteration_bounds = array<i64: 2>, scalar_prefetch = 0 : i64, scratch_operands = 0 : i64, tpu.core_type = #tpu.core_type<tc>, window_params = [{transform_indices = @transform_0, window_bounds = array<i64: 8, 8, 32>}, {transform_indices = @transform_1, window_bounds = array<i64: 8, 32>}, {transform_indices = @transform_2, window_bounds = array<i64: 8, 32>}, {transform_indices = @transform_3, window_bounds = array<i64: 8, 8>}]} {
    %c0 = arith.constant 0 : index
    %c0_0 = arith.constant 0 : index
    %c0_1 = arith.constant 0 : index
    %0 = vector.load %arg1[%c0, %c0_0, %c0_1] : memref<8x8x32xf32, #tpu.memory_space<vmem>>, vector<8x8x32xf32>
    %c0_2 = arith.constant 0 : index
    %c0_3 = arith.constant 0 : index
    %1 = vector.load %arg2[%c0_2, %c0_3] : memref<8x32xf32, #tpu.memory_space<vmem>>, vector<8x32xf32>
    %2 = vector.shape_cast %1 : vector<8x32xf32> to vector<8x1x32xf32>
    %3 = vector.broadcast %2 : vector<8x1x32xf32> to vector<8x8x32xf32>
    %4 = arith.mulf %0, %3 : vector<8x8x32xf32>
    %cst = arith.constant dense<0.000000e+00> : vector<8x8xf32>
    %5 = vector.multi_reduction <add>, %4, %cst [2] : vector<8x8x32xf32> to vector<8x8xf32>
    %cst_4 = arith.constant dense<0xFF800000> : vector<8xf32>
    %6 = vector.multi_reduction <maximumf>, %5, %cst_4 [1] : vector<8x8xf32> to vector<8xf32>
    %7 = vector.shape_cast %6 : vector<8xf32> to vector<8x1xf32>
    %8 = vector.broadcast %7 : vector<8x1xf32> to vector<8x8xf32>
    %9 = arith.subf %5, %8 : vector<8x8xf32>
    %10 = math.exp %9 : vector<8x8xf32>
    %cst_5 = arith.constant dense<0.000000e+00> : vector<8xf32>
    %11 = vector.multi_reduction <add>, %10, %cst_5 [1] : vector<8x8xf32> to vector<8xf32>
    %12 = vector.shape_cast %11 : vector<8xf32> to vector<8x1xf32>
    %13 = tpu.reciprocal %12 {approx = true} : vector<8x1xf32> -> vector<8x1xf32>
    %14 = vector.broadcast %13 : vector<8x1xf32> to vector<8x8xf32>
    %15 = arith.mulf %10, %14 : vector<8x8xf32>
    %16 = vector.shape_cast %15 : vector<8x8xf32> to vector<8x8x1xf32>
    %17 = vector.broadcast %16 : vector<8x8x1xf32> to vector<8x8x32xf32>
    %18 = arith.mulf %17, %0 : vector<8x8x32xf32>
    %cst_6 = arith.constant dense<0.000000e+00> : vector<8x32xf32>
    %19 = vector.multi_reduction <add>, %18, %cst_6 [1] : vector<8x8x32xf32> to vector<8x32xf32>
    %c0_7 = arith.constant 0 : index
    %c0_8 = arith.constant 0 : index
    %20 = vector.load %arg4[%c0_7, %c0_8] : memref<8x8xf32, #tpu.memory_space<vmem>>, vector<8x8xf32>
    tpu.vector_store %arg4[%c0_7, %c0_8], %15 {strides = array<i32>} : memref<8x8xf32, #tpu.memory_space<vmem>>, vector<8x8xf32>,
    %c0_9 = arith.constant 0 : index
    %c0_10 = arith.constant 0 : index
    %21 = vector.load %arg3[%c0_9, %c0_10] : memref<8x32xf32, #tpu.memory_space<vmem>>, vector<8x32xf32>
    tpu.vector_store %arg3[%c0_9, %c0_10], %19 {strides = array<i32>} : memref<8x32xf32, #tpu.memory_space<vmem>>, vector<8x32xf32>,
    return
  }
  func.func @transform_0(%arg0: i32) -> (i32, i32, i32) {
    %c0_i32 = arith.constant 0 : i32
    %c0_i32_0 = arith.constant 0 : i32
    %c0_i32_1 = arith.constant 0 : i32
    return %arg0, %c0_i32, %c0_i32_0 : i32, i32, i32
  }
  func.func @transform_1(%arg0: i32) -> (i32, i32) {
    %c0_i32 = arith.constant 0 : i32
    %c0_i32_0 = arith.constant 0 : i32
    return %arg0, %c0_i32 : i32, i32
  }
  func.func @transform_2(%arg0: i32) -> (i32, i32) {
    %c0_i32 = arith.constant 0 : i32
    %c0_i32_0 = arith.constant 0 : i32
    return %arg0, %c0_i32 : i32, i32
  }
  func.func @transform_3(%arg0: i32) -> (i32, i32) {
    %c0_i32 = arith.constant 0 : i32
    %c0_i32_0 = arith.constant 0 : i32
    return %arg0, %c0_i32 : i32, i32
  }
}

</mosaic_0001>

<llo_original>
// kernel: tpu_custom_call.1
$region0: #{tpu_custom_call.1}
  #allocation0 [shape = 'u32[]', space=smem, size = 0x4, offset = 0x4, fixed_abs, tag = 'smem constant byte address 0x4 - core index']
  #allocation1 [shape = 'u32[144,128]{1,0:T(1,128)}', space=vmem, size = 0x12000, scoped, tag = 'internal scratch']
  %s0 = inlined_call_operand.hbm [shape: f32[12,8,32], index: 0, kind: input, shape index: {}]
  %s1 = inlined_call_operand.hbm [shape: f32[12,32], index: 1, kind: input, shape index: {}]
  %s2 = inlined_call_operand.hbm [shape: f32[12,32], index: 2, kind: output, shape index: {0}]
  %s3 = inlined_call_operand.vmem [shape: f32[12,8], index: 3, kind: output, shape index: {1}]
  %4 = xla_tuple %s2, %s3
  %s5 = sld [smem:[#allocation0]]
  $region57: #{tpu_custom_call.1} parent=0
    _
  %s7 = ssub.s32 1, %s5
  %s8 = scalar_select 0, %s7, %s5
  $region1: #{tpu_custom_call.1} parent=0
    #allocation2 [shape = 'u8[65536]{0}', space=vmem, size = 0x10000, scoped, tag = 'input window, operand 0']
    #allocation3 [shape = 's32[2]{0}', space=sflag, size = 0x8, scoped, tag = 'scoped memory for tpu_custom_call.1']
    #allocation4 [shape = 's32[2]{0}', space=sflag, size = 0x8, scoped, tag = 'scoped memory for tpu_custom_call.1']
    #allocation5 [shape = 'u8[8192]{0}', space=vmem, size = 0x2000, scoped, tag = 'input window, operand 1']
    #allocation6 [shape = 's32[2]{0}', space=sflag, size = 0x8, scoped, tag = 'scoped memory for tpu_custom_call.1']
    #allocation7 [shape = 'u8[8192]{0}', space=vmem, size = 0x2000, scoped, tag = 'output window, operand 0']
    %9 = vsyncpa [#allocation3], 0
    %s10 = scalar_lea.sflag [#allocation3], 1
    %11 = vsyncpa %s10, 0
    %12 = vsyncpa [#allocation6], 0
    %s13 = scalar_lea.sflag [#allocation6], 1
    %14 = vsyncpa %s13, 0
    %15 = vsyncpa [#allocation4], 0
    %s16 = scalar_lea.sflag [#allocation4], 1
    %17 = vsyncpa %s16, 0
    loop: start=0, step=1, limit=4
    $region2: #{tpu_custom_call.1} parent=1 // loop_pre_header
      _
    $region3: #{tpu_custom_call.1} parent=1 // loop_header
      %s19 = sphi 0, %s23
      %p20 = scmp.ge.s32.totalorder %s19, 4
      %s29 = sphi 0, %s31
      %s32 = sphi 0, %s29
      %s33 = sphi 0, %s32
      %s49 = sphi 0, %s33
      %s55 = sphi 0, %s57
      %s58 = sphi 0, %s55
      %s59 = sphi 0, %s58
      %s75 = sphi 0, %s59
      %s81 = sphi 0, %s83
      %s84 = sphi 0, %s81
      %s85 = sphi 0, %s84
      %s101 = sphi 0, %s85
      %s107 = sphi 0, %s109
      %s110 = sphi 0, %s107
      %s111 = sphi 0, %s110
      %s127 = sphi 0, %s111
    $region4: #{tpu_custom_call.1} parent=1 // loop_header_branch
      %22 = sbr.rel (%p20) target = $region8
    $region5: #{tpu_custom_call.1} parent=1 // loop_body
      %s24 = ssub.s32 %s19, 1
      %s25 = ssub.s32 %s19, 2
      %s26 = sadd.s32 %s19, 1
      %s27 = ssub.s32 %s19, %s26
      %p28 = scmp.eq.s32.totalorder %s27, 0
      %s30 = sadd.s32 %s29, 1
      %s31 = scalar_select %p28, %s29, %s30
      %p34 = pneg %p28
      %p35 = scmp.eq.s32.totalorder %s19, 1
      %p36 = por %p34, %p35
      %p37 = scmp.ne.s32.totalorder %s29, %s32
      %p38 = scmp.eq.s32.totalorder %s19, 0
      %p39 = por %p37, %p38
      %p40 = scmp.ne.s32.totalorder %s29, %s32
      %p41 = scmp.eq.s32.totalorder %s24, 1
      %p42 = por %p40, %p41
      %p43 = scmp.ne.s32.totalorder %s32, %s33
      %p44 = scmp.eq.s32.totalorder %s24, 0
      %p45 = por %p43, %p44
      %p46 = scmp.ne.s32.totalorder %s32, %s33
      %p47 = scmp.eq.s32.totalorder %s25, 1
      %p48 = por %p46, %p47
      %p50 = scmp.ne.s32.totalorder %s33, %s49
      %p51 = scmp.eq.s32.totalorder %s25, 0
      %p52 = por %p50, %p51
      %s53 = ssub.s32 %s19, %s26
      %p54 = scmp.eq.s32.totalorder %s53, 0
      %s56 = sadd.s32 %s55, 1
      %s57 = scalar_select %p54, %s55, %s56
      %p60 = pneg %p54
      %p61 = scmp.eq.s32.totalorder %s19, 1
      %p62 = por %p60, %p61
      %p63 = scmp.ne.s32.totalorder %s55, %s58
      %p64 = scmp.eq.s32.totalorder %s19, 0
      %p65 = por %p63, %p64
      %p66 = scmp.ne.s32.totalorder %s55, %s58
      %p67 = scmp.eq.s32.totalorder %s24, 1
      %p68 = por %p66, %p67
      %p69 = scmp.ne.s32.totalorder %s58, %s59
      %p70 = scmp.eq.s32.totalorder %s24, 0
      %p71 = por %p69, %p70
      %p72 = scmp.ne.s32.totalorder %s58, %s59
      %p73 = scmp.eq.s32.totalorder %s25, 1
      %p74 = por %p72, %p73
      %p76 = scmp.ne.s32.totalorder %s59, %s75
      %p77 = scmp.eq.s32.totalorder %s25, 0
      %p78 = por %p76, %p77
      %s79 = ssub.s32 %s19, %s26
      %p80 = scmp.eq.s32.totalorder %s79, 0
      %s82 = sadd.s32 %s81, 1
      %s83 = scalar_select %p80, %s81, %s82
      %p86 = pneg %p80
      %p87 = scmp.eq.s32.totalorder %s19, 1
      %p88 = por %p86, %p87
      %p89 = scmp.ne.s32.totalorder %s81, %s84
      %p90 = scmp.eq.s32.totalorder %s19, 0
      %p91 = por %p89, %p90
      %p92 = scmp.ne.s32.totalorder %s81, %s84
      %p93 = scmp.eq.s32.totalorder %s24, 1
      %p94 = por %p92, %p93
      %p95 = scmp.ne.s32.totalorder %s84, %s85
      %p96 = scmp.eq.s32.totalorder %s24, 0
      %p97 = por %p95, %p96
      %p98 = scmp.ne.s32.totalorder %s84, %s85
      %p99 = scmp.eq.s32.totalorder %s25, 1
      %p100 = por %p98, %p99
      %p102 = scmp.ne.s32.totalorder %s85, %s101
      %p103 = scmp.eq.s32.totalorder %s25, 0
      %p104 = por %p102, %p103
      %s105 = ssub.s32 %s19, %s26
      %p106 = scmp.eq.s32.totalorder %s105, 0
      %s108 = sadd.s32 %s107, 1
      %s109 = scalar_select %p106, %s107, %s108
      %p112 = pneg %p106
      %p113 = scmp.eq.s32.totalorder %s19, 1
      %p114 = por %p112, %p113
      %p115 = scmp.ne.s32.totalorder %s107, %s110
      %p116 = scmp.eq.s32.totalorder %s19, 0
      %p117 = por %p115, %p116
      %p118 = scmp.ne.s32.totalorder %s107, %s110
      %p119 = scmp.eq.s32.totalorder %s24, 1
      %p120 = por %p118, %p119
      %p121 = scmp.ne.s32.totalorder %s110, %s111
      %p122 = scmp.eq.s32.totalorder %s24, 0
      %p123 = por %p121, %p122
      %p124 = scmp.ne.s32.totalorder %s110, %s111
      %p125 = scmp.eq.s32.totalorder %s25, 1
      %p126 = por %p124, %p125
      %p128 = scmp.ne.s32.totalorder %s111, %s127
      %p129 = scmp.eq.s32.totalorder %s25, 0
      %p130 = por %p128, %p129
      %p131 = scmp.le.s32.totalorder 1, %s19
      %p132 = scmp.lt.s32.totalorder %s19, 3
      %p133 = pnand %p131, %p132
      %p134 = pneg %p133
      // Predicated region
      $region9: #{tpu_custom_call.1} parent=5 // pred_check
        _
      $region10: #{tpu_custom_call.1} parent=5 // pred_check_branch
        %136 = sbr.rel (%p133) target = $region12
      $region11: #{tpu_custom_call.1} parent=5 // pred_region
        %s137 = ssub.s32 %s19, 1
      $region12: #{tpu_custom_call.1} parent=5 // pred_fallthru
        _
      %p138 = scmp.lt.s32.totalorder %s19, 2
      // Predicated region
      $region13: #{tpu_custom_call.1} parent=5 // pred_check
        %p139 = pneg %p138
      $region14: #{tpu_custom_call.1} parent=5 // pred_check_branch
        %141 = sbr.rel (%p139) target = $region16
      $region15: #{tpu_custom_call.1} parent=5 // pred_region
        // Predicated region
        $region17: #{tpu_custom_call.1} parent=15 // pred_check
          %p142 = pneg %p39
        $region18: #{tpu_custom_call.1} parent=15 // pred_check_branch
          %144 = sbr.rel (%p142) target = $region20
        $region19: #{tpu_custom_call.1} parent=15 // pred_region
          %s145 = sand.u32 %s29, 1
          %s146 = scalar_lea.sflag [#allocation3], %s145
          %s147 = sand.u32 %s29, 1
          %s148 = smul.addr %s147, 64
          %s149 = scalar_lea.vmem [#allocation2], %s148
          %s150 = smul.u32 8, %s19
          %s151 = ssub.s32 12, %s150
          %p152 = scmp.lt.s32.totalorder %s151, 8
          %s153 = scalar_select %p152, %s151, 8
          %s154 = smul.u32 128, %s153
          %s156 = ssub.s32 1024, %s154
          %157 = vsyncadd %s146, %s156
          %p158 = scmp.ne.s32.totalorder 0, %s154
          %s159 = smul.addr %s150, 128
          %s160 = scalar_lea.hbm %s0, %s159
          %s161 = smul.u32 8, %s153
          %s162 = sshll.u32 %s149, 4
          %s163 = int_to_ptr.vmem [resolvable:$true] %s162
          %s164 = sshll.u32 %s161, 4
          %168 = dma.hbm_to_vmem [thread:$0]  (%p158), %s160, %s164, %s163, %s146, 128, 128, 8
        $region20: #{tpu_custom_call.1} parent=15 // pred_fallthru
          _
        // Predicated region
        $region21: #{tpu_custom_call.1} parent=15 // pred_check
          %p169 = pneg %p65
        $region22: #{tpu_custom_call.1} parent=15 // pred_check_branch
          %171 = sbr.rel (%p169) target = $region24
        $region23: #{tpu_custom_call.1} parent=15 // pred_region
          %s172 = sand.u32 %s55, 1
          %s173 = scalar_lea.sflag [#allocation6], %s172
          %s174 = sand.u32 %s55, 1
          %s175 = smul.addr %s174, 8
          %s176 = scalar_lea.vmem [#allocation5], %s175
          %s178 = ssub.s32 128, 128
          %179 = vsyncadd %s173, %s178
          %s180 = smul.addr %s19, 128
          %s181 = scalar_lea.hbm %s1, %s180
          %s183 = sshll.u32 %s176, 4
          %s184 = int_to_ptr.vmem [resolvable:$true] %s183
          %186 = dma.hbm_to_vmem [thread:$0]  %s181, 128, %s184, %s173
        $region24: #{tpu_custom_call.1} parent=15 // pred_fallthru
          _
      $region16: #{tpu_custom_call.1} parent=5 // pred_fallthru
        _
      %p187 = scmp.le.s32.totalorder 1, %s19
      %p188 = scmp.lt.s32.totalorder %s19, 3
      %p189 = pnand %p187, %p188
      %p190 = pneg %p189
      // Predicated region
      $region25: #{tpu_custom_call.1} parent=5 // pred_check
        _
      $region26: #{tpu_custom_call.1} parent=5 // pred_check_branch
        %192 = sbr.rel (%p189) target = $region28
      $region27: #{tpu_custom_call.1} parent=5 // pred_region
        %s193 = ssub.s32 %s19, 1
        %s194 = sand.u32 %s32, 1
        %s195 = scalar_lea.sflag [#allocation3], %s194
        %s196 = sand.u32 %s32, 1
        %s197 = smul.addr %s196, 64
        %s198 = scalar_lea.vmem [#allocation2], %s197
        // Predicated region
        $region29: #{tpu_custom_call.1} parent=27 // pred_check
          %p199 = pneg %p45
        $region30: #{tpu_custom_call.1} parent=27 // pred_check_branch
          %201 = sbr.rel (%p199) target = $region32
        $region31: #{tpu_custom_call.1} parent=27 // pred_region
          %202 = dma.done %s195, 1024
        $region32: #{tpu_custom_call.1} parent=27 // pred_fallthru
          _
        %s203 = sand.u32 %s58, 1
        %s204 = scalar_lea.sflag [#allocation6], %s203
        %s205 = sand.u32 %s58, 1
        %s206 = smul.addr %s205, 8
        %s207 = scalar_lea.vmem [#allocation5], %s206
        // Predicated region
        $region33: #{tpu_custom_call.1} parent=27 // pred_check
          %p208 = pneg %p71
        $region34: #{tpu_custom_call.1} parent=27 // pred_check_branch
          %210 = sbr.rel (%p208) target = $region36
        $region35: #{tpu_custom_call.1} parent=27 // pred_region
          %211 = dma.done %s204, 128
        $region36: #{tpu_custom_call.1} parent=27 // pred_fallthru
          _
        %s212 = sand.u32 %s32, 1
        %s213 = scalar_lea.sflag [#allocation3], %s212
        %s214 = sand.u32 %s32, 1
        %s215 = smul.addr %s214, 64
        %s216 = scalar_lea.vmem [#allocation2], %s215
        %p217 = pneg %p45
        %p218 = pneg %p42
        %s219 = sand.u32 %s58, 1
        %s220 = scalar_lea.sflag [#allocation6], %s219
        %s221 = sand.u32 %s58, 1
        %s222 = smul.addr %s221, 8
        %s223 = scalar_lea.vmem [#allocation5], %s222
        %p224 = pneg %p71
        %p225 = pneg %p68
        %p226 = pneg %p97
        %p227 = pneg %p94
        %s228 = sand.u32 %s84, 1
        %s229 = scalar_lea.sflag [#allocation4], %s228
        %s230 = sand.u32 %s84, 1
        %s231 = smul.addr %s230, 8
        %s232 = scalar_lea.vmem [#allocation7], %s231
        %p233 = pneg %p123
        %p234 = pneg %p120
        %p235 = scmp.lt.s32.totalorder %s24, 1
        %s236 = scalar_select %p235, %s24, 1
        %s237 = smul.addr %s236, 8
        %s238 = scalar_lea.vmem %s3, %s237
        %s239 = smul.u32 8, %s24
        %s240 = ssub.s32 12, %s239
        %p241 = scmp.lt.s32.totalorder %s240, 8
        %s242 = scalar_select %p241, %s240, 8
        %s243 = smul.u32 128, %s242
        %p244 = scmp.lt.s32.totalorder %s24, 1
        %s245 = scalar_select %p244, %s24, 1
        %s246 = smul.addr %s245, 8
        %s247 = scalar_lea.vmem %s3, %s246
        %v248 = vld [vmem:[%s198] sm:$0xff]
        %v249 = vld [vmem:[%s198 + $0x8] sm:$0xff]
        %v250 = vld [vmem:[%s198 + $0x10] sm:$0xff]
        %v251 = vld [vmem:[%s198 + $0x18] sm:$0xff]
        %v252 = vld [vmem:[%s198 + $0x20] sm:$0xff]
        %v253 = vld [vmem:[%s198 + $0x28] sm:$0xff]
        %v254 = vld [vmem:[%s198 + $0x30] sm:$0xff]
        %v255 = vld [vmem:[%s198 + $0x38] sm:$0xff]
        %v256 = vld [vmem:[%s207] sm:$0xff]
        %v258 = vcombine.high %v256, %v256
        %v260 = vunpack.c.l.s4 1966171168
        %v261 = vunpack.c.0.s8 %v260
        %v262 = vlaneseq
        %v263 = vshrl.u32 %v262, 7
        %v264 = vsub.s32 %v261, %v263
        %v265 = vrot.slane %v256, %v264
        %v267 = vunpack.c.l.s4 1966171168
        %v268 = vunpack.c.0.s8 %v267
        %v269 = vlaneseq
        %v270 = vshrl.u32 %v269, 7
        %v271 = vsub.s32 %v268, %v270
        %v272 = vrot.slane %v258, %v271
        %v273 = vcombine.high %v265, %v265
        %v274 = vcombine.high %v272, %v272
        %v276 = vunpack.c.l.s4 1966171168
        %v277 = vunpack.c.0.s8 %v276
        %v278 = vlaneseq
        %v279 = vshrl.u32 %v278, 7
        %v280 = vsub.s32 %v277, %v279
        %v281 = vrot.slane %v265, %v280
        %v283 = vunpack.c.l.s4 1966171168
        %v284 = vunpack.c.0.s8 %v283
        %v285 = vlaneseq
        %v286 = vshrl.u32 %v285, 7
        %v287 = vsub.s32 %v284, %v286
        %v288 = vrot.slane %v272, %v287
        %v290 = vunpack.c.l.s4 1966171168
        %v291 = vunpack.c.0.s8 %v290
        %v292 = vlaneseq
        %v293 = vshrl.u32 %v292, 7
        %v294 = vsub.s32 %v291, %v293
        %v295 = vrot.slane %v273, %v294
        %v297 = vunpack.c.l.s4 1966171168
        %v298 = vunpack.c.0.s8 %v297
        %v299 = vlaneseq
        %v300 = vshrl.u32 %v299, 7
        %v301 = vsub.s32 %v298, %v300
        %v302 = vrot.slane %v274, %v301
        %v303 = vcombine.high %v281, %v281
        %v304 = vcombine.high %v288, %v288
        %v305 = vcombine.high %v295, %v295
        %v306 = vcombine.high %v302, %v302
        %v307 = vlaneseq
        %v308 = vshrl.u32 %v307, 7
        %v309 = vsub.s32 0, %v308
        %v310 = vrot.slane %v281, %v309
        %v311 = vlaneseq
        %v312 = vshrl.u32 %v311, 7
        %v313 = vsub.s32 0, %v312
        %v314 = vrot.slane %v295, %v313
        %v315 = vlaneseq
        %v316 = vshrl.u32 %v315, 7
        %v317 = vsub.s32 0, %v316
        %v318 = vrot.slane %v303, %v317
        %v319 = vlaneseq
        %v320 = vshrl.u32 %v319, 7
        %v321 = vsub.s32 0, %v320
        %v322 = vrot.slane %v305, %v321
        %v323 = vlaneseq
        %v324 = vshrl.u32 %v323, 7
        %v325 = vsub.s32 0, %v324
        %v326 = vrot.slane %v288, %v325
        %v327 = vlaneseq
        %v328 = vshrl.u32 %v327, 7
        %v329 = vsub.s32 0, %v328
        %v330 = vrot.slane %v302, %v329
        %v331 = vlaneseq
        %v332 = vshrl.u32 %v331, 7
        %v333 = vsub.s32 0, %v332
        %v334 = vrot.slane %v304, %v333
        %v335 = vlaneseq
        %v336 = vshrl.u32 %v335, 7
        %v337 = vsub.s32 0, %v336
        %v338 = vrot.slane %v306, %v337
        %v347 = vmul.f32 %v248, %v310
        %v348 = vmul.f32 %v249, %v314
        %v349 = vmul.f32 %v250, %v318
        %v350 = vmul.f32 %v251, %v322
        %v351 = vmul.f32 %v252, %v326
        %v352 = vmul.f32 %v253, %v330
        %v353 = vmul.f32 %v254, %v334
        %v354 = vmul.f32 %v255, %v338
        %vm355 = vcmask 261120
        %v356 = vsel %vm355, %v347, 0.0
        %357 = vadd.xlane.f32.xlu0 %v356
        %v358 = vpop.xlane.xlu0 %357
        %v359 = vsel %vm355, %v348, 0.0
        %360 = vadd.xlane.f32.xlu0 %v359
        %v361 = vpop.xlane.xlu0 %360
        %v362 = vsel %vm355, %v349, 0.0
        %363 = vadd.xlane.f32.xlu0 %v362
        %v364 = vpop.xlane.xlu0 %363
        %v365 = vsel %vm355, %v350, 0.0
        %366 = vadd.xlane.f32.xlu0 %v365
        %v367 = vpop.xlane.xlu0 %366
        %v368 = vsel %vm355, %v351, 0.0
        %369 = vadd.xlane.f32.xlu0 %v368
        %v370 = vpop.xlane.xlu0 %369
        %v371 = vsel %vm355, %v352, 0.0
        %372 = vadd.xlane.f32.xlu0 %v371
        %v373 = vpop.xlane.xlu0 %372
        %v374 = vsel %vm355, %v353, 0.0
        %375 = vadd.xlane.f32.xlu0 %v374
        %v376 = vpop.xlane.xlu0 %375
        %v377 = vsel %vm355, %v354, 0.0
        %378 = vadd.xlane.f32.xlu0 %v377
        %v379 = vpop.xlane.xlu0 %378
        %v388 = vlaneseq
        %v389 = vand.u32 %v388, 127
        %v390 = vlaneseq
        %v391 = vshrl.u32 %v390, 7
        %v392 = vsub.s32 %v389, %v391
        %v393 = vrot.slane %v358, %v392
        %v394 = vlaneseq
        %v395 = vshrl.u32 %v394, 7
        %v396 = vsub.s32 %v389, %v395
        %v397 = vrot.slane %v361, %v396
        %v398 = vlaneseq
        %v399 = vshrl.u32 %v398, 7
        %v400 = vsub.s32 %v389, %v399
        %v401 = vrot.slane %v364, %v400
        %v402 = vlaneseq
        %v403 = vshrl.u32 %v402, 7
        %v404 = vsub.s32 %v389, %v403
        %v405 = vrot.slane %v367, %v404
        %v406 = vlaneseq
        %v407 = vshrl.u32 %v406, 7
        %v408 = vsub.s32 %v389, %v407
        %v409 = vrot.slane %v370, %v408
        %v410 = vlaneseq
        %v411 = vshrl.u32 %v410, 7
        %v412 = vsub.s32 %v389, %v411
        %v413 = vrot.slane %v373, %v412
        %v414 = vlaneseq
        %v415 = vshrl.u32 %v414, 7
        %v416 = vsub.s32 %v389, %v415
        %v417 = vrot.slane %v376, %v416
        %v418 = vlaneseq
        %v419 = vshrl.u32 %v418, 7
        %v420 = vsub.s32 %v389, %v419
        %v421 = vrot.slane %v379, %v420
        %vm422 = vcmask 1041409
        %v423 = vsel %vm422, %v397, %v393
        %vm424 = vcmask 1042434
        %v425 = vsel %vm424, %v401, %v423
        %vm426 = vcmask 1043459
        %v427 = vsel %vm426, %v405, %v425
        %vm428 = vcmask 1044484
        %v429 = vsel %vm428, %v409, %v427
        %vm430 = vcmask 1045509
        %v431 = vsel %vm430, %v413, %v429
        %vm432 = vcmask 1046534
        %v433 = vsel %vm432, %v417, %v431
        %vm434 = vcmask 1047559
        %v435 = vsel %vm434, %v421, %v433
        %vm437 = vcmask 64512
        %v438 = vsel %vm437, %v435, -inf
        %439 = vmax.xlane.f32.xlu0 %v438
        %v440 = vpop.xlane.xlu0 %439
        %v442 = vlaneseq
        %v443 = vshrl.u32 %v442, 7
        %v444 = vsub.s32 0, %v443
        %v445 = vrot.slane %v440, %v444
        %v446 = vlaneseq
        %v447 = vshrl.u32 %v446, 7
        %v448 = vsub.s32 1, %v447
        %v449 = vrot.slane %v440, %v448
        %v450 = vlaneseq
        %v451 = vshrl.u32 %v450, 7
        %v452 = vsub.s32 2, %v451
        %v453 = vrot.slane %v440, %v452
        %v454 = vlaneseq
        %v455 = vshrl.u32 %v454, 7
        %v456 = vsub.s32 3, %v455
        %v457 = vrot.slane %v440, %v456
        %v458 = vlaneseq
        %v459 = vshrl.u32 %v458, 7
        %v460 = vsub.s32 4, %v459
        %v461 = vrot.slane %v440, %v460
        %v462 = vlaneseq
        %v463 = vshrl.u32 %v462, 7
        %v464 = vsub.s32 5, %v463
        %v465 = vrot.slane %v440, %v464
        %v466 = vlaneseq
        %v467 = vshrl.u32 %v466, 7
        %v468 = vsub.s32 6, %v467
        %v469 = vrot.slane %v440, %v468
        %v470 = vlaneseq
        %v471 = vshrl.u32 %v470, 7
        %v472 = vsub.s32 7, %v471
        %v473 = vrot.slane %v440, %v472
        %v482 = vsub.f32 %v358, %v445
        %v483 = vsub.f32 %v361, %v449
        %v484 = vsub.f32 %v364, %v453
        %v485 = vsub.f32 %v367, %v457
        %v486 = vsub.f32 %v370, %v461
        %v487 = vsub.f32 %v373, %v465
        %v488 = vsub.f32 %v376, %v469
        %v489 = vsub.f32 %v379, %v473
        %v490 = vmul.f32 %v482, 1.442695
        %v491 = vpow.pop %v490
        %v492 = vmul.f32 %v483, 1.442695
        %v493 = vpow.pop %v492
        %v494 = vmul.f32 %v484, 1.442695
        %v495 = vpow.pop %v494
        %v496 = vmul.f32 %v485, 1.442695
        %v497 = vpow.pop %v496
        %v498 = vmul.f32 %v486, 1.442695
        %v499 = vpow.pop %v498
        %v500 = vmul.f32 %v487, 1.442695
        %v501 = vpow.pop %v500
        %v502 = vmul.f32 %v488, 1.442695
        %v503 = vpow.pop %v502
        %v504 = vmul.f32 %v489, 1.442695
        %v505 = vpow.pop %v504
        %514 = vset.pattern.permute.xlu0 0
        %515 = vperm.xlu0 %514, %v491
        %v516 = vpop.permute.xlu0 %515
        %517 = vset.pattern.permute.xlu0 0
        %518 = vperm.xlu0 %517, %v493
        %v519 = vpop.permute.xlu0 %518
        %520 = vset.pattern.permute.xlu0 0
        %521 = vperm.xlu0 %520, %v495
        %v522 = vpop.permute.xlu0 %521
        %523 = vset.pattern.permute.xlu0 0
        %524 = vperm.xlu0 %523, %v497
        %v525 = vpop.permute.xlu0 %524
        %526 = vset.pattern.permute.xlu0 0
        %527 = vperm.xlu0 %526, %v499
        %v528 = vpop.permute.xlu0 %527
        %529 = vset.pattern.permute.xlu0 0
        %530 = vperm.xlu0 %529, %v501
        %v531 = vpop.permute.xlu0 %530
        %532 = vset.pattern.permute.xlu0 0
        %533 = vperm.xlu0 %532, %v503
        %v534 = vpop.permute.xlu0 %533
        %535 = vset.pattern.permute.xlu0 0
        %536 = vperm.xlu0 %535, %v505
        %v537 = vpop.permute.xlu0 %536
        %v538 = vlaneseq
        %v539 = vshrl.u32 %v538, 7
        %v540 = vsub.s32 %v389, %v539
        %v541 = vrot.slane %v516, %v540
        %v542 = vlaneseq
        %v543 = vshrl.u32 %v542, 7
        %v544 = vsub.s32 %v389, %v543
        %v545 = vrot.slane %v519, %v544
        %v546 = vlaneseq
        %v547 = vshrl.u32 %v546, 7
        %v548 = vsub.s32 %v389, %v547
        %v549 = vrot.slane %v522, %v548
        %v550 = vlaneseq
        %v551 = vshrl.u32 %v550, 7
        %v552 = vsub.s32 %v389, %v551
        %v553 = vrot.slane %v525, %v552
        %v554 = vlaneseq
        %v555 = vshrl.u32 %v554, 7
        %v556 = vsub.s32 %v389, %v555
        %v557 = vrot.slane %v528, %v556
        %v558 = vlaneseq
        %v559 = vshrl.u32 %v558, 7
        %v560 = vsub.s32 %v389, %v559
        %v561 = vrot.slane %v531, %v560
        %v562 = vlaneseq
        %v563 = vshrl.u32 %v562, 7
        %v564 = vsub.s32 %v389, %v563
        %v565 = vrot.slane %v534, %v564
        %v566 = vlaneseq
        %v567 = vshrl.u32 %v566, 7
        %v568 = vsub.s32 %v389, %v567
        %v569 = vrot.slane %v537, %v568
        %v570 = vsel %vm422, %v545, %v541
        %v571 = vsel %vm424, %v549, %v570
        %v572 = vsel %vm426, %v553, %v571
        %v573 = vsel %vm428, %v557, %v572
        %v574 = vsel %vm430, %v561, %v573
        %v575 = vsel %vm432, %v565, %v574
        %v576 = vsel %vm434, %v569, %v575
        %v578 = vsel %vm437, %v576, 0.0
        %579 = vadd.xlane.f32.xlu0 %v578
        %v580 = vpop.xlane.xlu0 %579
        %v581 = vrcp.pop %v580
        %v583 = vlaneseq
        %v584 = vshrl.u32 %v583, 7
        %v585 = vsub.s32 0, %v584
        %v586 = vrot.slane %v581, %v585
        %v587 = vlaneseq
        %v588 = vshrl.u32 %v587, 7
        %v589 = vsub.s32 1, %v588
        %v590 = vrot.slane %v581, %v589
        %v591 = vlaneseq
        %v592 = vshrl.u32 %v591, 7
        %v593 = vsub.s32 2, %v592
        %v594 = vrot.slane %v581, %v593
        %v595 = vlaneseq
        %v596 = vshrl.u32 %v595, 7
        %v597 = vsub.s32 3, %v596
        %v598 = vrot.slane %v581, %v597
        %v599 = vlaneseq
        %v600 = vshrl.u32 %v599, 7
        %v601 = vsub.s32 4, %v600
        %v602 = vrot.slane %v581, %v601
        %v603 = vlaneseq
        %v604 = vshrl.u32 %v603, 7
        %v605 = vsub.s32 5, %v604
        %v606 = vrot.slane %v581, %v605
        %v607 = vlaneseq
        %v608 = vshrl.u32 %v607, 7
        %v609 = vsub.s32 6, %v608
        %v610 = vrot.slane %v581, %v609
        %v611 = vlaneseq
        %v612 = vshrl.u32 %v611, 7
        %v613 = vsub.s32 7, %v612
        %v614 = vrot.slane %v581, %v613
        %v623 = vmul.f32 %v491, %v586
        %v624 = vmul.f32 %v493, %v590
        %v625 = vmul.f32 %v495, %v594
        %v626 = vmul.f32 %v497, %v598
        %v627 = vmul.f32 %v499, %v602
        %v628 = vmul.f32 %v501, %v606
        %v629 = vmul.f32 %v503, %v610
        %v630 = vmul.f32 %v505, %v614
        %632 = vset.pattern.permute.xlu0 0
        %633 = vperm.xlu0 %632, %v623
        %v634 = vpop.permute.xlu0 %633
        %637 = vset.pattern.permute.xlu0 0
        %638 = vperm.xlu0 %637, %v624
        %v639 = vpop.permute.xlu0 %638
        %642 = vset.pattern.permute.xlu0 0
        %643 = vperm.xlu0 %642, %v625
        %v644 = vpop.permute.xlu0 %643
        %647 = vset.pattern.permute.xlu0 0
        %648 = vperm.xlu0 %647, %v626
        %v649 = vpop.permute.xlu0 %648
        %652 = vset.pattern.permute.xlu0 0
        %653 = vperm.xlu0 %652, %v627
        %v654 = vpop.permute.xlu0 %653
        %657 = vset.pattern.permute.xlu0 0
        %658 = vperm.xlu0 %657, %v628
        %v659 = vpop.permute.xlu0 %658
        %662 = vset.pattern.permute.xlu0 0
        %663 = vperm.xlu0 %662, %v629
        %v664 = vpop.permute.xlu0 %663
        %667 = vset.pattern.permute.xlu0 0
        %668 = vperm.xlu0 %667, %v630
        %v669 = vpop.permute.xlu0 %668
        %v671 = vmul.f32 %v634, %v248
        %v672 = vmul.f32 %v639, %v249
        %v673 = vmul.f32 %v644, %v250
        %v674 = vmul.f32 %v649, %v251
        %v675 = vmul.f32 %v654, %v252
        %v676 = vmul.f32 %v659, %v253
        %v677 = vmul.f32 %v664, %v254
        %v678 = vmul.f32 %v669, %v255
        %v679 = vsel %vm355, %v671, 0.0
        %v680 = vrot.slane %v679, 4
        %v681 = vadd.f32 %v679, %v680
        %v682 = vrot.slane %v681, 2
        %v683 = vadd.f32 %v681, %v682
        %v684 = vrot.slane %v683, 1
        %v685 = vadd.f32 %v683, %v684
        %v686 = vsel %vm355, %v672, 0.0
        %v687 = vrot.slane %v686, 4
        %v688 = vadd.f32 %v686, %v687
        %v689 = vrot.slane %v688, 2
        %v690 = vadd.f32 %v688, %v689
        %v691 = vrot.slane %v690, 1
        %v692 = vadd.f32 %v690, %v691
        %v693 = vsel %vm355, %v673, 0.0
        %v694 = vrot.slane %v693, 4
        %v695 = vadd.f32 %v693, %v694
        %v696 = vrot.slane %v695, 2
        %v697 = vadd.f32 %v695, %v696
        %v698 = vrot.slane %v697, 1
        %v699 = vadd.f32 %v697, %v698
        %v700 = vsel %vm355, %v674, 0.0
        %v701 = vrot.slane %v700, 4
        %v702 = vadd.f32 %v700, %v701
        %v703 = vrot.slane %v702, 2
        %v704 = vadd.f32 %v702, %v703
        %v705 = vrot.slane %v704, 1
        %v706 = vadd.f32 %v704, %v705
        %v707 = vsel %vm355, %v675, 0.0
        %v708 = vrot.slane %v707, 4
        %v709 = vadd.f32 %v707, %v708
        %v710 = vrot.slane %v709, 2
        %v711 = vadd.f32 %v709, %v710
        %v712 = vrot.slane %v711, 1
        %v713 = vadd.f32 %v711, %v712
        %v714 = vsel %vm355, %v676, 0.0
        %v715 = vrot.slane %v714, 4
        %v716 = vadd.f32 %v714, %v715
        %v717 = vrot.slane %v716, 2
        %v718 = vadd.f32 %v716, %v717
        %v719 = vrot.slane %v718, 1
        %v720 = vadd.f32 %v718, %v719
        %v721 = vsel %vm355, %v677, 0.0
        %v722 = vrot.slane %v721, 4
        %v723 = vadd.f32 %v721, %v722
        %v724 = vrot.slane %v723, 2
        %v725 = vadd.f32 %v723, %v724
        %v726 = vrot.slane %v725, 1
        %v727 = vadd.f32 %v725, %v726
        %v728 = vsel %vm355, %v678, 0.0
        %v729 = vrot.slane %v728, 4
        %v730 = vadd.f32 %v728, %v729
        %v731 = vrot.slane %v730, 2
        %v732 = vadd.f32 %v730, %v731
        %v733 = vrot.slane %v732, 1
        %v734 = vadd.f32 %v732, %v733
        %v735 = vlaneseq
        %v736 = vshrl.u32 %v735, 7
        %v737 = vsub.s32 %v389, %v736
        %v738 = vrot.slane %v634, %v737
        %v739 = vlaneseq
        %v740 = vshrl.u32 %v739, 7
        %v741 = vsub.s32 %v389, %v740
        %v742 = vrot.slane %v639, %v741
        %v743 = vlaneseq
        %v744 = vshrl.u32 %v743, 7
        %v745 = vsub.s32 %v389, %v744
        %v746 = vrot.slane %v644, %v745
        %v747 = vlaneseq
        %v748 = vshrl.u32 %v747, 7
        %v749 = vsub.s32 %v389, %v748
        %v750 = vrot.slane %v649, %v749
        %v751 = vlaneseq
        %v752 = vshrl.u32 %v751, 7
        %v753 = vsub.s32 %v389, %v752
        %v754 = vrot.slane %v654, %v753
        %v755 = vlaneseq
        %v756 = vshrl.u32 %v755, 7
        %v757 = vsub.s32 %v389, %v756
        %v758 = vrot.slane %v659, %v757
        %v759 = vlaneseq
        %v760 = vshrl.u32 %v759, 7
        %v761 = vsub.s32 %v389, %v760
        %v762 = vrot.slane %v664, %v761
        %v763 = vlaneseq
        %v764 = vshrl.u32 %v763, 7
        %v765 = vsub.s32 %v389, %v764
        %v766 = vrot.slane %v669, %v765
        %v767 = vsel %vm422, %v742, %v738
        %v768 = vsel %vm424, %v746, %v767
        %v769 = vsel %vm426, %v750, %v768
        %v770 = vsel %vm428, %v754, %v769
        %v771 = vsel %vm430, %v758, %v770
        %v772 = vsel %vm432, %v762, %v771
        %v773 = vsel %vm434, %v766, %v772
        %775 = vst.msk [vmem:[%s247] sm:$0xff] %vm437, %v773
        %v784 = vsel %vm422, %v692, %v685
        %v785 = vsel %vm424, %v699, %v784
        %v786 = vsel %vm426, %v706, %v785
        %v787 = vsel %vm428, %v713, %v786
        %v788 = vsel %vm430, %v720, %v787
        %v789 = vsel %vm432, %v727, %v788
        %v790 = vsel %vm434, %v734, %v789
        %792 = vst.msk [vmem:[%s232] sm:$0xff] %vm355, %v790
        %s793 = sand.u32 %s84, 1
        %s794 = scalar_lea.sflag [#allocation4], %s793
        %s795 = sand.u32 %s84, 1
        %s796 = smul.addr %s795, 8
        %s797 = scalar_lea.vmem [#allocation7], %s796
        %p798 = scmp.lt.s32.totalorder %s24, 1
        %s799 = scalar_select %p798, %s24, 1
        %s800 = smul.addr %s799, 8
        %s801 = scalar_lea.vmem %s3, %s800
        // Predicated region
        $region37: #{tpu_custom_call.1} parent=27 // pred_check
          %p802 = pneg %p94
        $region38: #{tpu_custom_call.1} parent=27 // pred_check_branch
          %804 = sbr.rel (%p802) target = $region40
        $region39: #{tpu_custom_call.1} parent=27 // pred_region
          %s806 = ssub.s32 128, 128
          %807 = vsyncadd %s794, %s806
          %s808 = smul.addr %s24, 128
          %s809 = scalar_lea.hbm %s2, %s808
          %s811 = sshll.u32 %s797, 4
          %s812 = int_to_ptr.vmem [resolvable:$true] %s811
          %814 = dma.vmem_to_hbm [thread:$0]  %s812, 128, %s809, %s794
        $region40: #{tpu_custom_call.1} parent=27 // pred_fallthru
          _
        // Predicated region
        $region41: #{tpu_custom_call.1} parent=27 // pred_check
          %p815 = pneg %p120
        $region42: #{tpu_custom_call.1} parent=27 // pred_check_branch
          %817 = sbr.rel (%p815) target = $region44
        $region43: #{tpu_custom_call.1} parent=27 // pred_region
          _
        $region44: #{tpu_custom_call.1} parent=27 // pred_fallthru
          _
      $region28: #{tpu_custom_call.1} parent=5 // pred_fallthru
        _
      %p818 = scmp.le.s32.totalorder 2, %s19
      // Predicated region
      $region45: #{tpu_custom_call.1} parent=5 // pred_check
        %p819 = pneg %p818
      $region46: #{tpu_custom_call.1} parent=5 // pred_check_branch
        %821 = sbr.rel (%p819) target = $region48
      $region47: #{tpu_custom_call.1} parent=5 // pred_region
        %s822 = ssub.s32 %s19, 2
        // Predicated region
        $region49: #{tpu_custom_call.1} parent=47 // pred_check
          %p823 = pneg %p100
        $region50: #{tpu_custom_call.1} parent=47 // pred_check_branch
          %825 = sbr.rel (%p823) target = $region52
        $region51: #{tpu_custom_call.1} parent=47 // pred_region
          %s826 = sand.u32 %s85, 1
          %s827 = scalar_lea.sflag [#allocation4], %s826
          %s828 = sand.u32 %s85, 1
          %s829 = smul.addr %s828, 8
          %s830 = scalar_lea.vmem [#allocation7], %s829
          %831 = dma.done %s827, 128
        $region52: #{tpu_custom_call.1} parent=47 // pred_fallthru
          _
        // Predicated region
        $region53: #{tpu_custom_call.1} parent=47 // pred_check
          %p832 = pneg %p126
        $region54: #{tpu_custom_call.1} parent=47 // pred_check_branch
          %834 = sbr.rel (%p832) target = $region56
        $region55: #{tpu_custom_call.1} parent=47 // pred_region
          %p835 = scmp.lt.s32.totalorder %s25, 1
          %s836 = scalar_select %p835, %s25, 1
          %s837 = smul.addr %s836, 8
          %s838 = scalar_lea.vmem %s3, %s837
        $region56: #{tpu_custom_call.1} parent=47 // pred_fallthru
          _
      $region48: #{tpu_custom_call.1} parent=5 // pred_fallthru
        _
    $region6: #{tpu_custom_call.1} parent=1 // loop_footer
      %s23 = sadd.s32 1, %s19
    $region7: #{tpu_custom_call.1} parent=1 // loop_footer_branch
      %18 = sbr.rel target = $region3
    $region8: #{tpu_custom_call.1} parent=1 // loop_exit
      _
    %839 = vsyncpa [#allocation3], 1
    %s840 = scalar_lea.sflag [#allocation3], 1
    %841 = vsyncpa %s840, 1
    %842 = vsyncpa [#allocation6], 1
    %s843 = scalar_lea.sflag [#allocation6], 1
    %844 = vsyncpa %s843, 1
    %845 = vsyncpa [#allocation4], 1
    %s846 = scalar_lea.sflag [#allocation4], 1
    %847 = vsyncpa %s846, 1

</llo_original>
